<compile_context>
chip_gen: v7x
topology: tpu7x:2x2x1
jax: 0.10.0
libtpu: 0.0.40
codegen_flags: <defaults>
</compile_context>

<pallas_src>
import functools

import jax
import jax.numpy as jnp
from jax.experimental import pallas as pl
from jax.experimental.pallas import tpu as pltpu


def _round_up(x, m):
    return ((x + m - 1) // m) * m


def _pick_row_tile(h, itemsize):
    """Largest power-of-two row tile whose double-buffered streams fit a
    conservative VMEM budget (fits v5e's 16 MiB scoped default with headroom,
    and v7x's 64 MiB physical VMEM)."""
    budget = 8 * 1024 * 1024
    per_row = 2 * (4 + h * itemsize)  # double-buffered int32 idx row + out row
    tm = 1024
    while tm > 8 and tm * per_row > budget:
        tm //= 2
    return max(8, tm)


def _tie_kernel(idx_ref, table_ref, w_ref, out_ref, *, n_freq, vocab):
    ids = idx_ref[...]                                       # (TM, 1) int32
    tm = ids.shape[0]

    # Fused embedding gather: one-hot @ table on the MXU. Exactly reproduces
    # table[idx] (single 1.0 per row => exact selection).
    lanes = jax.lax.broadcasted_iota(jnp.int32, (tm, vocab), 1)
    onehot = (lanes == ids).astype(table_ref.dtype)          # (TM, vocab)
    emb = jnp.dot(onehot, table_ref[...],
                  preferred_element_type=jnp.float32)        # (TM, H)

    # Linear projection (MXU, f32 accumulation).
    weight = jnp.dot(emb.astype(w_ref.dtype), w_ref[...],
                     preferred_element_type=jnp.float32)     # (TM, H)

    h = weight.shape[-1]
    # Static n_freq -> edge cases resolved at trace time, matching PyTorch.
    if n_freq == 0:
        out = weight
    elif n_freq == h:
        out = jnp.sin(weight)
    else:
        lane = jax.lax.broadcasted_iota(jnp.int32, weight.shape, 1)
        out = jnp.where(lane < n_freq, weight, jnp.sin(weight))
    out_ref[...] = out.astype(out_ref.dtype)


def temporal_information_embedding(idx, embedding_table, linear, *, n_freq):
    """idx: (B, T) int32 indices; embedding_table: (vocab, H); linear: (H, H)."""
    B, T = idx.shape
    vocab, H = embedding_table.shape
    assert linear.shape == (H, H)
    assert 0 <= n_freq <= H

    BT = B * T
    itemsize = jnp.dtype(embedding_table.dtype).itemsize
    TM = min(_pick_row_tile(H, itemsize), _round_up(BT, 8))
    BT_pad = _round_up(BT, TM)

    # Flatten (and pad) the indices; padded rows use index 0 (valid) and are
    # sliced off at the end.
    idx_flat = idx.reshape(-1).astype(jnp.int32)
    if BT_pad > BT:
        idx_flat = jnp.pad(idx_flat, (0, BT_pad - BT))
    idx_col = idx_flat.reshape(BT_pad, 1)

    kernel = functools.partial(_tie_kernel, n_freq=n_freq, vocab=vocab)

    out_flat = pl.pallas_call(
        kernel,
        out_shape=jax.ShapeDtypeStruct((BT_pad, H), embedding_table.dtype),
        grid_spec=pltpu.PrefetchScalarGridSpec(
            num_scalar_prefetch=0,
            grid=(BT_pad // TM,),
            in_specs=[
                pl.BlockSpec((TM, 1), lambda i: (i, 0)),       # idx rows (streamed)
                pl.BlockSpec((vocab, H), lambda i: (0, 0)),    # table (resident)
                pl.BlockSpec((H, H), lambda i: (0, 0)),        # W (resident)
            ],
            out_specs=pl.BlockSpec((TM, H), lambda i: (i, 0)),
        ),
        compiler_params=pltpu.CompilerParams(
            dimension_semantics=("parallel",),
        ),
    )(idx_col, embedding_table, linear)

    # TODO(synk): for H < 128, a lane-dense output repack ((BT/k, k*H) slab)
    # would avoid masked stores, but requires an in-kernel relayout; skipped.
    return out_flat[:BT].reshape(B, T, H)


def reference(idx, embedding_table, linear, *, n_freq):
    emb = jnp.take(embedding_table, idx, axis=0)              # (B, T, H)
    weight = jnp.einsum("blc,cd->bld", emb, linear)
    if n_freq == 0:
        return weight
    if n_freq == emb.shape[-1]:
        return jnp.sin(weight)
    return jnp.concatenate(
        [weight[..., :n_freq], jnp.sin(weight[..., n_freq:])], axis=-1
    )


if __name__ == "__main__":
    # Small shapes consistent with the module: B=2, T=8, hidden=32, vocab=7.
    B, T, H, vocab = 2, 8, 32, 7

    key = jax.random.PRNGKey(0)
    k_idx, k_emb, k_lin = jax.random.split(key, 3)

    idx = jax.random.randint(k_idx, (B, T), 0, vocab, dtype=jnp.int32)
    embedding_table = jax.random.normal(k_emb, (vocab, H), dtype=jnp.float32)
    linear = jax.random.normal(k_lin, (H, H), dtype=jnp.float32)

    # Check the general case and both PyTorch edge cases (n_freq = 0 and H).
    for n_freq in (1, 0, H):
        out = temporal_information_embedding(
            idx, embedding_table, linear, n_freq=n_freq
        )
        out = jax.block_until_ready(out)
        ref = reference(idx, embedding_table, linear, n_freq=n_freq)
        assert out.shape == (B, T, H)
        assert jnp.allclose(out, ref, atol=1e-5, rtol=1e-5), (
            f"mismatch vs reference at n_freq={n_freq}"
        )

    print("KERNEL_OK")
</pallas_src>

<mosaic_0001>
module attributes {stable_mosaic.version = 11 : i64} {
  func.func @_tie_kernel(%arg0: i32, %arg1: memref<16x1xi32, #tpu.memory_space<vmem>>, %arg2: memref<7x32xf32, #tpu.memory_space<vmem>>, %arg3: memref<32x32xf32, #tpu.memory_space<vmem>>, %arg4: memref<16x32xf32, #tpu.memory_space<vmem>>) attributes {dimension_semantics = [#tpu.dimension_semantics<parallel>], iteration_bounds = array<i64: 1>, scalar_prefetch = 0 : i64, scratch_operands = 0 : i64, tpu.core_type = #tpu.core_type<tc>, window_params = [{transform_indices = @transform_0, window_bounds = array<i64: 16, 1>}, {pipeline_mode = #tpu.pipeline_mode<synchronous>, transform_indices = @transform_1, window_bounds = array<i64: 7, 32>}, {pipeline_mode = #tpu.pipeline_mode<synchronous>, transform_indices = @transform_2, window_bounds = array<i64: 32, 32>}, {transform_indices = @transform_3, window_bounds = array<i64: 16, 32>}]} {
    %c0 = arith.constant 0 : index
    %c0_0 = arith.constant 0 : index
    %0 = vector.load %arg1[%c0, %c0_0] : memref<16x1xi32, #tpu.memory_space<vmem>>, vector<16x1xi32>
    %1 = tpu.iota {dimensions = array<i32: 1>} : vector<16x7xi32>
    %2 = vector.broadcast %0 : vector<16x1xi32> to vector<16x7xi32>
    %3 = arith.cmpi eq, %1, %2 : vector<16x7xi32>
    %4 = arith.extui %3 : vector<16x7xi1> to vector<16x7xi32>
    %5 = arith.sitofp %4 : vector<16x7xi32> to vector<16x7xf32>
    %c0_1 = arith.constant 0 : index
    %c0_2 = arith.constant 0 : index
    %6 = vector.load %arg2[%c0_1, %c0_2] : memref<7x32xf32, #tpu.memory_space<vmem>>, vector<7x32xf32>
    %cst = arith.constant dense<0.000000e+00> : vector<16x32xf32>
    %7 = tpu.matmul %5, %6, %cst {dimension_numbers = #tpu.dot_dimension_numbers<[1], [0], [0], [1], [0, 0, 1, 1], [], []>} : vector<16x7xf32>, vector<7x32xf32>, vector<16x32xf32> -> vector<16x32xf32>
    %c0_3 = arith.constant 0 : index
    %c0_4 = arith.constant 0 : index
    %8 = vector.load %arg3[%c0_3, %c0_4] : memref<32x32xf32, #tpu.memory_space<vmem>>, vector<32x32xf32>
    %cst_5 = arith.constant dense<0.000000e+00> : vector<16x32xf32>
    %9 = tpu.matmul %7, %8, %cst_5 {dimension_numbers = #tpu.dot_dimension_numbers<[1], [0], [0], [1], [0, 0, 1, 1], [], []>} : vector<16x32xf32>, vector<32x32xf32>, vector<16x32xf32> -> vector<16x32xf32>
    %10 = tpu.iota {dimensions = array<i32: 1>} : vector<16x32xi32>
    %c1_i32 = arith.constant 1 : i32
    %11 = vector.broadcast %c1_i32 : i32 to vector<16x32xi32>
    %12 = arith.cmpi slt, %10, %11 : vector<16x32xi32>
    %13 = math.sin %9 : vector<16x32xf32>
    %14 = arith.select %12, %9, %13 : vector<16x32xi1>, vector<16x32xf32>
    %c0_6 = arith.constant 0 : index
    %c0_7 = arith.constant 0 : index
    %15 = vector.load %arg4[%c0_6, %c0_7] : memref<16x32xf32, #tpu.memory_space<vmem>>, vector<16x32xf32>
    tpu.vector_store %arg4[%c0_6, %c0_7], %14 {strides = array<i32>} : memref<16x32xf32, #tpu.memory_space<vmem>>, vector<16x32xf32>,
    return
  }
  func.func @transform_0(%arg0: i32) -> (i32, i32) {
    %c0_i32 = arith.constant 0 : i32
    %c0_i32_0 = arith.constant 0 : i32
    return %arg0, %c0_i32 : i32, i32
  }
  func.func @transform_1(%arg0: i32) -> (i32, i32) {
    %c0_i32 = arith.constant 0 : i32
    %c0_i32_0 = arith.constant 0 : i32
    %c0_i32_1 = arith.constant 0 : i32
    return %c0_i32, %c0_i32_0 : i32, i32
  }
  func.func @transform_2(%arg0: i32) -> (i32, i32) {
    %c0_i32 = arith.constant 0 : i32
    %c0_i32_0 = arith.constant 0 : i32
    %c0_i32_1 = arith.constant 0 : i32
    return %c0_i32, %c0_i32_0 : i32, i32
  }
  func.func @transform_3(%arg0: i32) -> (i32, i32) {
    %c0_i32 = arith.constant 0 : i32
    %c0_i32_0 = arith.constant 0 : i32
    return %arg0, %c0_i32 : i32, i32
  }
}

</mosaic_0001>

<llo_original>
// kernel: tpu_custom_call.1
$region0: #{tpu_custom_call.1}
  #allocation0 [shape = 'u32[]', space=smem, size = 0x4, offset = 0x4, fixed_abs, tag = 'smem constant byte address 0x4 - core index']
  #allocation1 [shape = 'u32[144,128]{1,0:T(1,128)}', space=vmem, size = 0x12000, scoped, tag = 'internal scratch']
  %s0 = inlined_call_operand.vmem [shape: s32[16,1], index: 0, kind: input, shape index: {}]
  %s1 = inlined_call_operand.vmem [shape: f32[7,32], index: 1, kind: input, shape index: {}]
  %s2 = inlined_call_operand.hbm [shape: f32[32,32], index: 2, kind: input, shape index: {}]
  %s3 = inlined_call_operand.hbm [shape: f32[16,32], index: 3, kind: output, shape index: {}]
  %s4 = sld [smem:[#allocation0]]
  $region26: #{tpu_custom_call.1} parent=0
    _
  %s6 = ssub.s32 1, %s4
  %s7 = scalar_select 0, %s6, %s4
  $region1: #{tpu_custom_call.1} parent=0
    #allocation2 [shape = 'u8[16384]{0}', space=vmem, size = 0x4000, scoped, tag = 'input window, operand 2, single buffered']
    #allocation3 [shape = 's32[1]{0}', space=sflag, size = 0x4, scoped, tag = 'scoped memory for tpu_custom_call.1']
    #allocation4 [shape = 's32[1]{0}', space=sflag, size = 0x4, scoped, tag = 'scoped memory for tpu_custom_call.1']
    #allocation5 [shape = 'u8[8192]{0}', space=vmem, size = 0x2000, scoped, tag = 'output window, operand 0, single buffered']
    %8 = vsyncpa [#allocation3], 0
    %9 = vsyncpa [#allocation4], 0
    // Predicated region
    $region2: #{tpu_custom_call.1} parent=1 // pred_check
      _
    $region3: #{tpu_custom_call.1} parent=1 // pred_check_branch
      %11 = sbr.rel (0) target = $region5
    $region4: #{tpu_custom_call.1} parent=1 // pred_region
      _
    $region5: #{tpu_custom_call.1} parent=1 // pred_fallthru
      _
    // Predicated region
    $region6: #{tpu_custom_call.1} parent=1 // pred_check
      _
    $region7: #{tpu_custom_call.1} parent=1 // pred_check_branch
      %13 = sbr.rel (0) target = $region9
    $region8: #{tpu_custom_call.1} parent=1 // pred_region
      _
    $region9: #{tpu_custom_call.1} parent=1 // pred_fallthru
      _
    // Predicated region
    $region10: #{tpu_custom_call.1} parent=1 // pred_check
      _
    $region11: #{tpu_custom_call.1} parent=1 // pred_check_branch
      %15 = sbr.rel (0) target = $region13
    $region12: #{tpu_custom_call.1} parent=1 // pred_region
      %s17 = ssub.s32 512, 512
      %18 = vsyncadd [#allocation3], %s17
      %s19 = sshll.u32 [#allocation2], 4
      %s20 = int_to_ptr.vmem [resolvable:$true] %s19
      %25 = dma.hbm_to_vmem [thread:$0]  %s2, 512, %s20, [#allocation3], 128, 128, 8
    $region13: #{tpu_custom_call.1} parent=1 // pred_fallthru
      _
    // Predicated region
    $region14: #{tpu_custom_call.1} parent=1 // pred_check
      _
    $region15: #{tpu_custom_call.1} parent=1 // pred_check_branch
      %27 = sbr.rel (0) target = $region17
    $region16: #{tpu_custom_call.1} parent=1 // pred_region
      %28 = dma.done [#allocation3], 512
    $region17: #{tpu_custom_call.1} parent=1 // pred_fallthru
      _
    %v29 = vld [vmem:[%s0] sm:$0xff]
    %v30 = vld [vmem:[%s0 + $0x8] sm:$0xff]
    %v31 = vlaneseq
    %v32 = vand.u32 %v31, 127
    %33 = vset.pattern.permute.xlu0 0
    %34 = vperm.xlu0 %33, %v29
    %v35 = vpop.permute.xlu0 %34
    %36 = vset.pattern.permute.xlu0 0
    %37 = vperm.xlu0 %36, %v30
    %v38 = vpop.permute.xlu0 %37
    %vm39 = vcmp.eq.s32.totalorder %v32, %v35
    %vm40 = vcmp.eq.s32.totalorder %v32, %v38
    %v41 = vsel %vm39, 1, 0
    %v42 = vsel %vm40, 1, 0
    %v43 = vcvt.s32.f32 %v41
    %v44 = vcvt.s32.f32 %v42
    %v45 = vld [vmem:[%s1] sm:$0x7f]
    %vm46 = vcmask 56320
    %v48 = vsel %vm46, %v43, 0
    %v51 = vsel %vm46, %v44, 0
    %vm53 = vcmask 1046528
    %v55 = vsel %vm53, %v45, 0
    %57 = vmatprep.subr.mxu0 0.0
    %58 = vmatpush1.msra.mxu0 %v55
    %59 = vmatprep.subr.mxu0 0.0
    %60 = vmatpush1.msra.mxu0 0.0
    %61 = vmatprep.subr.mxu0 0.0
    %62 = vmatpush1.msra.mxu0 0.0
    %63 = vmatprep.subr.mxu0 0.0
    %64 = vmatpush1.msra.mxu0 0.0
    %65 = vmatprep.subr.mxu0 0.0
    %66 = vmatpush1.msra.mxu0 0.0
    %67 = vmatprep.subr.mxu0 0.0
    %68 = vmatpush1.msra.mxu0 0.0
    %69 = vmatprep.subr.mxu0 0.0
    %70 = vmatpush1.msra.mxu0 0.0
    %71 = vmatprep.subr.mxu0 0.0
    %72 = vmatpush1.msra.mxu0 0.0
    %73 = vmatprep.subr.mxu0 0.0
    %74 = vmatpush1.msra.mxu0 0.0
    %75 = vmatprep.subr.mxu0 0.0
    %76 = vmatpush1.msra.mxu0 0.0
    %77 = vmatprep.subr.mxu0 0.0
    %78 = vmatpush1.msra.mxu0 0.0
    %79 = vmatprep.subr.mxu0 0.0
    %80 = vmatpush1.msra.mxu0 0.0
    %81 = vmatprep.subr.mxu0 0.0
    %82 = vmatpush1.msra.mxu0 0.0
    %83 = vmatprep.subr.mxu0 0.0
    %84 = vmatpush1.msra.mxu0 0.0
    %85 = vmatprep.subr.mxu0 0.0
    %86 = vmatpush1.msra.mxu0 0.0
    %87 = vmatprep.subr.mxu0 0.0
    %88 = vmatpush1.msra.mxu0 0.0
    %89 = vmatprep.subr.mxu0 0.0
    %90 = vmatpush1.msra.mxu0 0.0
    %91 = vmatprep.subr.mxu0 0.0
    %92 = vmatpush1.msra.mxu0 0.0
    %93 = vmatprep.subr.mxu0 0.0
    %94 = vmatpush1.msra.mxu0 0.0
    %95 = vmatprep.subr.mxu0 0.0
    %96 = vmatpush1.msra.mxu0 0.0
    %97 = vmatprep.subr.mxu0 0.0
    %98 = vmatpush1.msra.mxu0 0.0
    %99 = vmatprep.subr.mxu0 0.0
    %100 = vmatpush1.msra.mxu0 0.0
    %101 = vmatprep.subr.mxu0 0.0
    %102 = vmatpush1.msra.mxu0 0.0
    %103 = vmatprep.subr.mxu0 0.0
    %104 = vmatpush1.msra.mxu0 0.0
    %105 = vmatprep.subr.mxu0 0.0
    %106 = vmatpush1.msra.mxu0 0.0
    %107 = vmatprep.subr.mxu0 0.0
    %108 = vmatpush1.msra.mxu0 0.0
    %109 = vmatprep.subr.mxu0 0.0
    %110 = vmatpush1.msra.mxu0 0.0
    %111 = vmatprep.subr.mxu0 0.0
    %112 = vmatpush1.msra.mxu0 0.0
    %113 = vmatprep.subr.mxu0 0.0
    %114 = vmatpush1.msra.mxu0 0.0
    %115 = vmatprep.subr.mxu0 0.0
    %116 = vmatpush1.msra.mxu0 0.0
    %117 = vmatprep.subr.mxu0 0.0
    %118 = vmatpush1.msra.mxu0 0.0
    %119 = vmatprep.subr.mxu0 0.0
    %120 = vmatpush1.msra.mxu0 0.0
    %121 = vmatprep.mubr.f32.mxu0 0.0
    %122 = vmatmul.mubr.f32.gmra.mrb[0].mxu0 %v48
    %v123 = vpop.f32.mrb[0].mxu0
    %v124 = vadd.f32 0.0, %v123
    %v125 = vpop.f32.mrb[0].mxu0
    %126 = vmatprep.mubr.f32.mxu0 0.0
    %127 = vmatmul.mubr.f32.gmra.mrb[0].mxu0 %v51
    %v128 = vpop.f32.mrb[0].mxu0
    %v129 = vadd.f32 0.0, %v128
    %v130 = vpop.f32.mrb[0].mxu0
    %131 = vdwg.mxu0
    %v132 = vld [vmem:[#allocation2] sm:$0xff]
    %v133 = vld [vmem:[#allocation2 + $0x8] sm:$0xff]
    %v134 = vld [vmem:[#allocation2 + $0x10] sm:$0xff]
    %v135 = vld [vmem:[#allocation2 + $0x18] sm:$0xff]
    %vm136 = vcmask 261120
    %v138 = vsel %vm136, %v124, 0
    %v141 = vsel %vm136, %v129, 0
    %143 = vmatprep.subr.mxu0 0.0
    %144 = vmatpush1.msra.mxu0 %v132
    %145 = vmatprep.subr.mxu0 0.0
    %146 = vmatpush1.msra.mxu0 %v133
    %147 = vmatprep.subr.mxu0 0.0
    %148 = vmatpush1.msra.mxu0 %v134
    %149 = vmatprep.subr.mxu0 0.0
    %150 = vmatpush1.msra.mxu0 %v135
    %151 = vmatprep.subr.mxu0 0.0
    %152 = vmatpush1.msra.mxu0 0.0
    %153 = vmatprep.subr.mxu0 0.0
    %154 = vmatpush1.msra.mxu0 0.0
    %155 = vmatprep.subr.mxu0 0.0
    %156 = vmatpush1.msra.mxu0 0.0
    %157 = vmatprep.subr.mxu0 0.0
    %158 = vmatpush1.msra.mxu0 0.0
    %159 = vmatprep.subr.mxu0 0.0
    %160 = vmatpush1.msra.mxu0 0.0
    %161 = vmatprep.subr.mxu0 0.0
    %162 = vmatpush1.msra.mxu0 0.0
    %163 = vmatprep.subr.mxu0 0.0
    %164 = vmatpush1.msra.mxu0 0.0
    %165 = vmatprep.subr.mxu0 0.0
    %166 = vmatpush1.msra.mxu0 0.0
    %167 = vmatprep.subr.mxu0 0.0
    %168 = vmatpush1.msra.mxu0 0.0
    %169 = vmatprep.subr.mxu0 0.0
    %170 = vmatpush1.msra.mxu0 0.0
    %171 = vmatprep.subr.mxu0 0.0
    %172 = vmatpush1.msra.mxu0 0.0
    %173 = vmatprep.subr.mxu0 0.0
    %174 = vmatpush1.msra.mxu0 0.0
    %175 = vmatprep.subr.mxu0 0.0
    %176 = vmatpush1.msra.mxu0 0.0
    %177 = vmatprep.subr.mxu0 0.0
    %178 = vmatpush1.msra.mxu0 0.0
    %179 = vmatprep.subr.mxu0 0.0
    %180 = vmatpush1.msra.mxu0 0.0
    %181 = vmatprep.subr.mxu0 0.0
    %182 = vmatpush1.msra.mxu0 0.0
    %183 = vmatprep.subr.mxu0 0.0
    %184 = vmatpush1.msra.mxu0 0.0
    %185 = vmatprep.subr.mxu0 0.0
    %186 = vmatpush1.msra.mxu0 0.0
    %187 = vmatprep.subr.mxu0 0.0
    %188 = vmatpush1.msra.mxu0 0.0
    %189 = vmatprep.subr.mxu0 0.0
    %190 = vmatpush1.msra.mxu0 0.0
    %191 = vmatprep.subr.mxu0 0.0
    %192 = vmatpush1.msra.mxu0 0.0
    %193 = vmatprep.subr.mxu0 0.0
    %194 = vmatpush1.msra.mxu0 0.0
    %195 = vmatprep.subr.mxu0 0.0
    %196 = vmatpush1.msra.mxu0 0.0
    %197 = vmatprep.subr.mxu0 0.0
    %198 = vmatpush1.msra.mxu0 0.0
    %199 = vmatprep.subr.mxu0 0.0
    %200 = vmatpush1.msra.mxu0 0.0
    %201 = vmatprep.subr.mxu0 0.0
    %202 = vmatpush1.msra.mxu0 0.0
    %203 = vmatprep.subr.mxu0 0.0
    %204 = vmatpush1.msra.mxu0 0.0
    %205 = vmatprep.subr.mxu0 0.0
    %206 = vmatpush1.msra.mxu0 0.0
    %207 = vmatprep.mubr.f32.mxu0 0.0
    %208 = vmatmul.mubr.f32.gmra.mrb[0].mxu0 %v138
    %v209 = vpop.f32.mrb[0].mxu0
    %v210 = vadd.f32 0.0, %v209
    %v211 = vpop.f32.mrb[0].mxu0
    %212 = vmatprep.mubr.f32.mxu0 0.0
    %213 = vmatmul.mubr.f32.gmra.mrb[0].mxu0 %v141
    %v214 = vpop.f32.mrb[0].mxu0
    %v215 = vadd.f32 0.0, %v214
    %v216 = vpop.f32.mrb[0].mxu0
    %217 = vdwg.mxu0
    %vm218 = vcmp.lt.s32.totalorder %v32, 1
    %v219 = vand.u32 2147483647, %v210
    %vm220 = vcmp.le.f32.partialorder %v219, 0.7853982
    %vm221 = vcmp.lt.s32.totalorder %v210, 0
    %v222 = vand.u32 %v210, 2139095040
    %v223 = vshrl.u32 %v222, 23
    %v224 = vsub.s32 %v223, 127
    %v225 = vand.u32 2147483647, %v210
    %v226 = vand.u32 %v225, 8388607
    %v227 = vor.u32 %v226, 8388608
    %v228 = vsub.s32 0, %v227
    %v229 = vadd.s32 %v224, 1
    %vm230 = vcmp.gt.s32.totalorder %v229, 0
    %v231 = vsel %vm230, %v229, 0
    %v232 = vshrl.u32 %v231, 5
    %v233 = vand.u32 %v231, 31
    %v234 = vsub.s32 32, %v233
    %v235 = vshrl.u32 683565275, %v234
    %v236 = vshll.u32 683565275, %v233
    %v237 = vshrl.u32 2475754826, %v234
    %v238 = vor.u32 %v236, %v237
    %v239 = vshll.u32 2475754826, %v233
    %v240 = vshrl.u32 2131351028, %v234
    %v241 = vor.u32 %v239, %v240
    %v242 = vshll.u32 2131351028, %v233
    %v243 = vshrl.u32 2102212464, %v234
    %v244 = vor.u32 %v242, %v243
    %v245 = vshll.u32 2102212464, %v233
    %v246 = vshrl.u32 920167782, %v234
    %v247 = vor.u32 %v245, %v246
    %v248 = vshll.u32 920167782, %v233
    %v249 = vshrl.u32 1326507024, %v234
    %v250 = vor.u32 %v248, %v249
    %vm251 = vcmp.lt.s32.totalorder %v232, 1
    %vm252 = vcmp.lt.s32.totalorder %v232, 2
    %vm253 = vcmp.lt.s32.totalorder %v232, 3
    %vm254 = vcmp.lt.s32.totalorder %v232, 4
    %v255 = vsel %vm251, %v235, %v238
    %v256 = vsel %vm254, %v244, 2102212464
    %v257 = vsel %vm253, %v241, %v256
    %v258 = vsel %vm252, %v255, %v257
    %v259 = vsel %vm251, %v238, %v241
    %v260 = vsel %vm254, %v247, 920167782
    %v261 = vsel %vm253, %v244, %v260
    %v262 = vsel %vm252, %v259, %v261
    %v263 = vsel %vm251, %v241, %v244
    %v264 = vsel %vm254, %v250, 1326507024
    %v265 = vsel %vm253, %v247, %v264
    %v266 = vsel %vm252, %v263, %v265
    %v267 = vshll.u32 %v227, 8
    %v268 = vmul.u32.u64.compose %v267, %v266
    %v269 = vextract.low.u32 %v268
    %v270 = vextract.high.u32 %v268
    %v271 = vmul.u32.u64.compose %v267, %v262
    %v272 = vextract.low.u32 %v271
    %v273 = vextract.high.u32 %v271
    %v274 = vmul.u32 %v267, %v258
    %v275 = vadd.s32 %v270, %v272
    %vm276 = vc.u32 %v270, %v272
    %v277 = vadd.s32 %v273, 1
    %v278 = vsel %vm276, %v277, %v273
    %v279 = vadd.s32 %v274, %v278
    %v280 = vadd.s32 %v279, 536870912
    %v281 = vshrl.u32 %v280, 30
    %v282 = vshll.u32 %v281, 30
    %v283 = vsub.s32 %v279, %v282
    %vm284 = vcmp.lt.s32.totalorder %v283, 0
    %v285 = vsub.s32 0, %v283
    %v286 = vsel %vm284, %v285, %v283
    %v287 = vclz %v286
    %v288 = vsub.s32 %v287, 2
    %vm289 = vcmp.gt.s32.totalorder 0, %v288
    %v290 = vsel %vm289, 0, %v288
    %v291 = vsub.s32 32, %v290
    %v292 = vshll.u32 %v283, %v290
    %v293 = vshrl.u32 %v275, %v291
    %v294 = vor.u32 %v292, %v293
    %v295 = vsub.s32 4294967266, %v290
    %v296 = vadd.s32 %v295, 127
    %v297 = vshll.u32 %v296, 23
    %v298 = vor.u32 4788187, %v297
    %v299 = vand.u32 2147483647, %v298
    %v301 = vcvt.s32.f32 %v294
    %v302 = vmul.f32 %v301, %v299
    %v303 = vxor.u32 %v302, 2147483648
    %v304 = vsel %vm221, %v303, %v302
    %v305 = vsub.s32 4, %v281
    %v306 = vsel %vm221, %v305, %v281
    %v307 = vsel %vm220, %v210, %v304
    %v308 = vsel %vm220, 0, %v306
    %v309 = vcosq.f32.pop %v307
    %v310 = vsinq.f32.pop %v307
    %vm311 = vweird.f32 %v210
    %v312 = vadd.s32 %v308, 3
    %v313 = vand.u32 %v312, 3
    %vm314 = vcmp.lt.s32.totalorder %v313, 2
    %vm315 = vcmp.eq.s32.totalorder %v313, 0
    %v316 = vxor.u32 %v310, 2147483648
    %v317 = vsel %vm315, %v309, %v316
    %vm318 = vcmp.eq.s32.totalorder %v313, 2
    %v319 = vxor.u32 %v309, 2147483648
    %v320 = vsel %vm318, %v319, %v310
    %v321 = vsel %vm314, %v317, %v320
    %v322 = vsel %vm311, nan, %v321
    %v323 = vand.u32 2147483647, %v215
    %vm324 = vcmp.le.f32.partialorder %v323, 0.7853982
    %vm325 = vcmp.lt.s32.totalorder %v215, 0
    %v326 = vand.u32 %v215, 2139095040
    %v327 = vshrl.u32 %v326, 23
    %v328 = vsub.s32 %v327, 127
    %v329 = vand.u32 2147483647, %v215
    %v330 = vand.u32 %v329, 8388607
    %v331 = vor.u32 %v330, 8388608
    %v332 = vsub.s32 0, %v331
    %v333 = vadd.s32 %v328, 1
    %vm334 = vcmp.gt.s32.totalorder %v333, 0
    %v335 = vsel %vm334, %v333, 0
    %v336 = vshrl.u32 %v335, 5
    %v337 = vand.u32 %v335, 31
    %v338 = vsub.s32 32, %v337
    %v339 = vshrl.u32 683565275, %v338
    %v340 = vshll.u32 683565275, %v337
    %v341 = vshrl.u32 2475754826, %v338
    %v342 = vor.u32 %v340, %v341
    %v343 = vshll.u32 2475754826, %v337
    %v344 = vshrl.u32 2131351028, %v338
    %v345 = vor.u32 %v343, %v344
    %v346 = vshll.u32 2131351028, %v337
    %v347 = vshrl.u32 2102212464, %v338
    %v348 = vor.u32 %v346, %v347
    %v349 = vshll.u32 2102212464, %v337
    %v350 = vshrl.u32 920167782, %v338
    %v351 = vor.u32 %v349, %v350
    %v352 = vshll.u32 920167782, %v337
    %v353 = vshrl.u32 1326507024, %v338
    %v354 = vor.u32 %v352, %v353
    %vm355 = vcmp.lt.s32.totalorder %v336, 1
    %vm356 = vcmp.lt.s32.totalorder %v336, 2
    %vm357 = vcmp.lt.s32.totalorder %v336, 3
    %vm358 = vcmp.lt.s32.totalorder %v336, 4
    %v359 = vsel %vm355, %v339, %v342
    %v360 = vsel %vm358, %v348, 2102212464
    %v361 = vsel %vm357, %v345, %v360
    %v362 = vsel %vm356, %v359, %v361
    %v363 = vsel %vm355, %v342, %v345
    %v364 = vsel %vm358, %v351, 920167782
    %v365 = vsel %vm357, %v348, %v364
    %v366 = vsel %vm356, %v363, %v365
    %v367 = vsel %vm355, %v345, %v348
    %v368 = vsel %vm358, %v354, 1326507024
    %v369 = vsel %vm357, %v351, %v368
    %v370 = vsel %vm356, %v367, %v369
    %v371 = vshll.u32 %v331, 8
    %v372 = vmul.u32.u64.compose %v371, %v370
    %v373 = vextract.low.u32 %v372
    %v374 = vextract.high.u32 %v372
    %v375 = vmul.u32.u64.compose %v371, %v366
    %v376 = vextract.low.u32 %v375
    %v377 = vextract.high.u32 %v375
    %v378 = vmul.u32 %v371, %v362
    %v379 = vadd.s32 %v374, %v376
    %vm380 = vc.u32 %v374, %v376
    %v381 = vadd.s32 %v377, 1
    %v382 = vsel %vm380, %v381, %v377
    %v383 = vadd.s32 %v378, %v382
    %v384 = vadd.s32 %v383, 536870912
    %v385 = vshrl.u32 %v384, 30
    %v386 = vshll.u32 %v385, 30
    %v387 = vsub.s32 %v383, %v386
    %vm388 = vcmp.lt.s32.totalorder %v387, 0
    %v389 = vsub.s32 0, %v387
    %v390 = vsel %vm388, %v389, %v387
    %v391 = vclz %v390
    %v392 = vsub.s32 %v391, 2
    %vm393 = vcmp.gt.s32.totalorder 0, %v392
    %v394 = vsel %vm393, 0, %v392
    %v395 = vsub.s32 32, %v394
    %v396 = vshll.u32 %v387, %v394
    %v397 = vshrl.u32 %v379, %v395
    %v398 = vor.u32 %v396, %v397
    %v399 = vsub.s32 4294967266, %v394
    %v400 = vadd.s32 %v399, 127
    %v401 = vshll.u32 %v400, 23
    %v402 = vor.u32 4788187, %v401
    %v403 = vand.u32 2147483647, %v402
    %v405 = vcvt.s32.f32 %v398
    %v406 = vmul.f32 %v405, %v403
    %v407 = vxor.u32 %v406, 2147483648
    %v408 = vsel %vm325, %v407, %v406
    %v409 = vsub.s32 4, %v385
    %v410 = vsel %vm325, %v409, %v385
    %v411 = vsel %vm324, %v215, %v408
    %v412 = vsel %vm324, 0, %v410
    %v413 = vcosq.f32.pop %v411
    %v414 = vsinq.f32.pop %v411
    %vm415 = vweird.f32 %v215
    %v416 = vadd.s32 %v412, 3
    %v417 = vand.u32 %v416, 3
    %vm418 = vcmp.lt.s32.totalorder %v417, 2
    %vm419 = vcmp.eq.s32.totalorder %v417, 0
    %v420 = vxor.u32 %v414, 2147483648
    %v421 = vsel %vm419, %v413, %v420
    %vm422 = vcmp.eq.s32.totalorder %v417, 2
    %v423 = vxor.u32 %v413, 2147483648
    %v424 = vsel %vm422, %v423, %v414
    %v425 = vsel %vm418, %v421, %v424
    %v426 = vsel %vm415, nan, %v425
    %v427 = vsel %vm218, %v210, %v322
    %v428 = vsel %vm218, %v215, %v426
    %429 = vst.msk [vmem:[#allocation5] sm:$0xff] %vm136, %v427
    %430 = vst.msk [vmem:[#allocation5 + $0x8] sm:$0xff] %vm136, %v428
    // Predicated region
    $region18: #{tpu_custom_call.1} parent=1 // pred_check
      _
    $region19: #{tpu_custom_call.1} parent=1 // pred_check_branch
      %432 = sbr.rel (0) target = $region21
    $region20: #{tpu_custom_call.1} parent=1 // pred_region
      %s434 = ssub.s32 256, 256
      %435 = vsyncadd [#allocation4], %s434
      %s436 = sshll.u32 [#allocation5], 4
      %s437 = int_to_ptr.vmem [resolvable:$true] %s436
      %442 = dma.vmem_to_hbm [thread:$0]  %s437, 256, %s3, [#allocation4], 128, 128, 8
    $region21: #{tpu_custom_call.1} parent=1 // pred_fallthru
      _
    // Predicated region
    $region22: #{tpu_custom_call.1} parent=1 // pred_check
      _
    $region23: #{tpu_custom_call.1} parent=1 // pred_check_branch
      %444 = sbr.rel (0) target = $region25
    $region24: #{tpu_custom_call.1} parent=1 // pred_region
      %445 = dma.done [#allocation4], 256
    $region25: #{tpu_custom_call.1} parent=1 // pred_fallthru
      _
    %446 = vsyncpa [#allocation3], 1
    %447 = vsyncpa [#allocation4], 1

</llo_original>
